<compile_context>
chip_gen: v6e
topology: v6e:2x2x1
jax: 0.10.0
libtpu: 0.0.40
codegen_flags: <defaults>
</compile_context>

<pallas_src>
import functools

import jax
import jax.numpy as jnp
from jax.experimental import pallas as pl
from jax.experimental.pallas import tpu as pltpu


# ----------------------------- helpers -----------------------------

def _round_up(x, m):
    return ((x + m - 1) // m) * m


def _tile(dim, target):
    # Full-dim block when the dim is small (always layout-legal); otherwise a
    # tile of size `target` (targets are multiples of (8, 128)).
    return dim if dim <= target else target


def _pad2d(x, rows, cols):
    r, c = x.shape
    if r == rows and c == cols:
        return x
    return jnp.pad(x, ((0, rows - r), (0, cols - c)))


def _vmem_limit_bytes():
    # ~3/4 of physical VMEM: ~96 MiB on v5e/v6e (128 MiB), ~48 MiB on v7x (64 MiB).
    try:
        cap = int(getattr(pltpu.get_tpu_info(), "vmem_capacity_bytes", 64 << 20))
    except Exception:
        cap = 64 << 20
    return int(min(cap * 3 // 4, 100 << 20))


def _mxu_operand_types():
    """(operand dtype, accumulator dtype) for the binarized-adjacency matmul."""
    try:
        kind = jax.devices()[0].device_kind.lower()
    except Exception:
        kind = ""
    if "v5" in kind or "v6" in kind:
        # v5e/v6e MXU int8 path: 2x the bf16 rate and half the DMA bytes.
        return jnp.int8, jnp.int32
    # TODO(synk): on v7x (no integer MXU) float8_e4m3fn would halve bytes again.
    return jnp.bfloat16, jnp.float32


# ----------------------------- kernels -----------------------------

def _scores_kernel(h_ref, w_ref, b_ref, out_ref):
    # VPU reduce over the feature axis: h (tm, D), w (1, D), b (1, 1) -> (tm, 1).
    logits = jnp.sum(h_ref[...] * w_ref[...], axis=1, keepdims=True) + b_ref[...]
    out_ref[...] = jax.nn.sigmoid(logits)


def _twohop_matmul_kernel(a_ref, b_ref, o_ref, acc_ref, *, acc_dtype):
    # Tiled matmul with wide accumulation; binarize on the last k step.
    @pl.when(pl.program_id(2) == 0)
    def _():
        acc_ref[...] = jnp.zeros_like(acc_ref)

    acc_ref[...] += jnp.dot(a_ref[...], b_ref[...],
                            preferred_element_type=acc_dtype)

    @pl.when(pl.program_id(2) == pl.num_programs(2) - 1)
    def _():
        # torch: matmul(...).bool().float() — counts are exact small ints.
        o_ref[...] = (acc_ref[...] != 0).astype(o_ref.dtype)


def _norm_kernel(sub_ref, inv_ref, g_out_ref):
    # g_out[i, j] = sub[i, j] / degrees[j]   (torch broadcast of sum(g, 1))
    g_out_ref[...] = sub_ref[...].astype(jnp.float32) * inv_ref[...]


def _scale_h_kernel(hsel_ref, vals_ref, h_out_ref):
    # new_h[i, :] = h[idx[i], :] * values[i]
    h_out_ref[...] = hsel_ref[...] * vals_ref[...]


# ----------------------------- wrapper -----------------------------

def pool_forward(g, h, w, b, k, *, t_out=1024, t_red=2048, t_scores=512):
    """Pallas implementation of Pool.forward. Returns (g_norm, new_h, idx)."""
    N, D = h.shape
    assert g.shape == (N, N)
    vmem_limit = _vmem_limit_bytes()

    # ---- 1) scores = sigmoid(h @ w + b): row-blocked VPU reduce over D ----
    tm_s = _tile(N, t_scores)
    Np_s = _round_up(N, tm_s)
    h_rows = _pad2d(h, Np_s, D)
    scores_col = pl.pallas_call(
        _scores_kernel,
        grid=(Np_s // tm_s,),
        in_specs=[pl.BlockSpec((tm_s, D), lambda i: (i, 0)),
                  pl.BlockSpec((1, D), lambda i: (0, 0)),
                  pl.BlockSpec((1, 1), lambda i: (0, 0))],
        out_specs=pl.BlockSpec((tm_s, 1), lambda i: (i, 0)),
        out_shape=jax.ShapeDtypeStruct((Np_s, 1), jnp.float32),
        compiler_params=pltpu.CompilerParams(dimension_semantics=("parallel",)),
    )(h_rows, w.T, b)
    scores = scores_col[:N, 0]

    # ---- 2) top-k selection (plain JAX glue; matches torch.topk ordering) ----
    # TODO(synk): sort + scattered gather has no clean Pallas equivalent here.
    K = max(2, int(k * N))
    values, idx = jax.lax.top_k(scores, K)

    # ---- 3) two-hop K x K sub-block:  (bg[idx, :] @ bg[:, idx]) != 0 ----
    # Gather rows/cols of the binarized adjacency BEFORE the matmul (K*K*N MACs
    # instead of N^3); feed the MXU narrow 0/1 operands, accumulate wide.
    op_dtype, acc_dtype = _mxu_operand_types()
    lhs = (g[idx, :] != 0).astype(op_dtype)          # (K, N)
    rhs = (g[:, idx] != 0).astype(op_dtype)          # (N, K)

    tko = _tile(K, t_out)                            # output tile (rows & cols)
    tkr = _tile(N, t_red)                            # contraction tile
    Kp = _round_up(K, tko)
    Np = _round_up(N, tkr)
    lhs_p = _pad2d(lhs, Kp, Np)                      # zero pad: exact for matmul
    rhs_p = _pad2d(rhs, Np, Kp)

    op_bytes = jnp.dtype(op_dtype).itemsize
    sub_bin_p = pl.pallas_call(
        functools.partial(_twohop_matmul_kernel, acc_dtype=acc_dtype),
        grid=(Kp // tko, Kp // tko, Np // tkr),
        in_specs=[pl.BlockSpec((tko, tkr), lambda i, j, kk: (i, kk)),
                  pl.BlockSpec((tkr, tko), lambda i, j, kk: (kk, j))],
        out_specs=pl.BlockSpec((tko, tko), lambda i, j, kk: (i, j)),
        out_shape=jax.ShapeDtypeStruct((Kp, Kp), jnp.bfloat16),   # 0/1 exact in bf16
        scratch_shapes=[pltpu.VMEM((tko, tko), acc_dtype)],
        cost_estimate=pl.CostEstimate(
            flops=2 * Kp * Kp * Np,
            transcendentals=0,
            bytes_accessed=2 * Kp * Np * op_bytes + Kp * Kp * 2),
        compiler_params=pltpu.CompilerParams(
            dimension_semantics=("parallel", "parallel", "arbitrary"),
            vmem_limit_bytes=vmem_limit),
    )(lhs_p, rhs_p)

    # ---- 4) normalization (column-tiled) + feature scaling ----
    # degrees[j] = sum_c sub[j, c]; force f32 accumulation over the bf16 block.
    # Padded rows/cols are exactly 0, so sums are correct for all real rows and
    # the where() keeps padded reciprocals at 0 (no NaN in the padded region).
    deg = jnp.sum(sub_bin_p, axis=1, dtype=jnp.float32)            # (Kp,)
    inv_deg = jnp.where(deg > 0.0, 1.0 / deg, 0.0)[None, :]        # (1, Kp)
    h_sel_p = _pad2d(h[idx, :], Kp, D)
    vals_p = _pad2d(values[:, None], Kp, 1)

    # Column-tiled broadcast multiply; tiles reuse tko so they divide Kp and a
    # single block never exceeds a few MiB (safe on v7x's 64 MiB VMEM).
    g_norm_p = pl.pallas_call(
        _norm_kernel,
        grid=(Kp // tko, Kp // tko),
        in_specs=[pl.BlockSpec((tko, tko), lambda i, j: (i, j)),
                  pl.BlockSpec((1, tko), lambda i, j: (0, j))],
        out_specs=pl.BlockSpec((tko, tko), lambda i, j: (i, j)),
        out_shape=jax.ShapeDtypeStruct((Kp, Kp), jnp.float32),
        compiler_params=pltpu.CompilerParams(
            dimension_semantics=("parallel", "parallel"),
            vmem_limit_bytes=vmem_limit),
    )(sub_bin_p, inv_deg)

    new_h_p = pl.pallas_call(
        _scale_h_kernel,
        grid=(Kp // tko,),
        in_specs=[pl.BlockSpec((tko, D), lambda i: (i, 0)),
                  pl.BlockSpec((tko, 1), lambda i: (i, 0))],
        out_specs=pl.BlockSpec((tko, D), lambda i: (i, 0)),
        out_shape=jax.ShapeDtypeStruct((Kp, D), jnp.float32),
        compiler_params=pltpu.CompilerParams(dimension_semantics=("parallel",)),
    )(h_sel_p, vals_p)

    return g_norm_p[:K, :K], new_h_p[:K, :], idx


# -------------------- pure-JAX reference (correctness) --------------------

def pool_forward_ref(g, h, w, b, k):
    scores = jax.nn.sigmoid((h @ w + b)[:, 0])
    N = g.shape[0]
    K = max(2, int(k * N))
    values, idx = jax.lax.top_k(scores, K)
    new_h = h[idx, :] * values[:, None]
    un_g = (g != 0).astype(jnp.float32)
    un_g = ((un_g @ un_g) != 0).astype(jnp.float32)
    un_g = un_g[idx, :][:, idx]
    deg = jnp.sum(un_g, axis=1)
    g_out = un_g / deg[None, :]
    return g_out, new_h, idx


if __name__ == "__main__":
    key = jax.random.PRNGKey(0)
    k_g, k_h, k_w = jax.random.split(key, 3)

    N, D = 256, 32        # nodes, in_dim (small but MXU/layout-aligned)
    pool_k = 0.5          # Pool(k=0.5, in_dim=32, p=0.0)

    # adjacency with self-loops (avoids zero-degree division)
    g = (jax.random.uniform(k_g, (N, N)) > 0.6).astype(jnp.float32)
    g = jnp.maximum(g, jnp.eye(N, dtype=jnp.float32))
    h = jax.random.normal(k_h, (N, D), dtype=jnp.float32)

    # deterministic Linear(in_dim, 1) parameters (synthetic init, not a checkpoint)
    w = jax.random.normal(k_w, (D, 1), dtype=jnp.float32) * 0.1
    b = jnp.zeros((1, 1), dtype=jnp.float32)

    g_out, new_h, idx = pool_forward(g, h, w, b, pool_k)
    jax.block_until_ready((g_out, new_h, idx))

    g_ref, h_ref, idx_ref = pool_forward_ref(g, h, w, b, pool_k)
    assert jnp.array_equal(idx, idx_ref), "index mismatch"
    assert jnp.allclose(g_out, g_ref, atol=1e-5), "graph mismatch"
    assert jnp.allclose(new_h, h_ref, atol=1e-5), "feature mismatch"

    print("KERNEL_OK")
</pallas_src>

<mosaic_0001>
module attributes {stable_mosaic.version = 11 : i64} {
  func.func @_scores_kernel(%arg0: i32, %arg1: memref<256x32xf32, #tpu.memory_space<vmem>>, %arg2: memref<1x32xf32, #tpu.memory_space<vmem>>, %arg3: memref<1x1xf32, #tpu.memory_space<vmem>>, %arg4: memref<256x1xf32, #tpu.memory_space<vmem>>) attributes {dimension_semantics = [#tpu.dimension_semantics<parallel>], iteration_bounds = array<i64: 1>, scalar_prefetch = 0 : i64, scratch_operands = 0 : i64, tpu.core_type = #tpu.core_type<tc>, window_params = [{transform_indices = @transform_0, window_bounds = array<i64: 256, 32>}, {pipeline_mode = #tpu.pipeline_mode<synchronous>, transform_indices = @transform_1, window_bounds = array<i64: 1, 32>}, {pipeline_mode = #tpu.pipeline_mode<synchronous>, transform_indices = @transform_2, window_bounds = array<i64: 1, 1>}, {transform_indices = @transform_3, window_bounds = array<i64: 256, 1>}]} {
    %c0 = arith.constant 0 : index
    %c0_0 = arith.constant 0 : index
    %0 = vector.load %arg1[%c0, %c0_0] : memref<256x32xf32, #tpu.memory_space<vmem>>, vector<256x32xf32>
    %c0_1 = arith.constant 0 : index
    %c0_2 = arith.constant 0 : index
    %1 = vector.load %arg2[%c0_1, %c0_2] : memref<1x32xf32, #tpu.memory_space<vmem>>, vector<1x32xf32>
    %2 = vector.broadcast %1 : vector<1x32xf32> to vector<256x32xf32>
    %3 = arith.mulf %0, %2 : vector<256x32xf32>
    %cst = arith.constant dense<0.000000e+00> : vector<256xf32>
    %4 = vector.multi_reduction <add>, %3, %cst [1] : vector<256x32xf32> to vector<256xf32>
    %5 = vector.shape_cast %4 : vector<256xf32> to vector<256x1xf32>
    %c0_3 = arith.constant 0 : index
    %c0_4 = arith.constant 0 : index
    %6 = vector.load %arg3[%c0_3, %c0_4] : memref<1x1xf32, #tpu.memory_space<vmem>>, vector<1x1xf32>
    %7 = vector.broadcast %6 : vector<1x1xf32> to vector<256x1xf32>
    %8 = arith.addf %5, %7 : vector<256x1xf32>
    %9 = arith.negf %8 : vector<256x1xf32>
    %10 = math.exp %9 : vector<256x1xf32>
    %cst_5 = arith.constant 1.000000e+00 : f32
    %11 = vector.broadcast %cst_5 : f32 to vector<256x1xf32>
    %12 = arith.addf %11, %10 : vector<256x1xf32>
    %13 = arith.divf %11, %12 : vector<256x1xf32>
    %c0_6 = arith.constant 0 : index
    %c0_7 = arith.constant 0 : index
    %14 = vector.load %arg4[%c0_6, %c0_7] : memref<256x1xf32, #tpu.memory_space<vmem>>, vector<256x1xf32>
    tpu.vector_store %arg4[%c0_6, %c0_7], %13 {strides = array<i32>} : memref<256x1xf32, #tpu.memory_space<vmem>>, vector<256x1xf32>,
    return
  }
  func.func @transform_0(%arg0: i32) -> (i32, i32) {
    %c0_i32 = arith.constant 0 : i32
    %c0_i32_0 = arith.constant 0 : i32
    return %arg0, %c0_i32 : i32, i32
  }
  func.func @transform_1(%arg0: i32) -> (i32, i32) {
    %c0_i32 = arith.constant 0 : i32
    %c0_i32_0 = arith.constant 0 : i32
    %c0_i32_1 = arith.constant 0 : i32
    return %c0_i32, %c0_i32_0 : i32, i32
  }
  func.func @transform_2(%arg0: i32) -> (i32, i32) {
    %c0_i32 = arith.constant 0 : i32
    %c0_i32_0 = arith.constant 0 : i32
    %c0_i32_1 = arith.constant 0 : i32
    return %c0_i32, %c0_i32_0 : i32, i32
  }
  func.func @transform_3(%arg0: i32) -> (i32, i32) {
    %c0_i32 = arith.constant 0 : i32
    %c0_i32_0 = arith.constant 0 : i32
    return %arg0, %c0_i32 : i32, i32
  }
}

</mosaic_0001>

<llo_original>
// kernel: tpu_custom_call.1
$region0: #{tpu_custom_call.1}
  #allocation0 [shape = 'u32[]', space=smem, size = 0x4, offset = 0x4, fixed_abs, tag = 'smem constant byte address 0x4 - core index']
  #allocation1 [shape = 'u32[144,128]{1,0:T(1,128)}', space=vmem, size = 0x12000, scoped, tag = 'internal scratch']
  #allocation2 [shape = 'f32[1,1]{1,0:T(1,128)S(1)}', space=vmem, size = 0x200, scoped, tag = 'scoped memory for tpu_custom_call.1']
  %s0 = inlined_call_operand.vmem [shape: f32[256,32], index: 0, kind: input, shape index: {}]
  %s1 = inlined_call_operand.vmem [shape: f32[1,32], index: 1, kind: input, shape index: {}]
  %s2 = inlined_call_operand.<no memory space> [shape: f32[1,1], index: 2, kind: input, shape index: {}]
  %s3 = inlined_call_operand.vmem [shape: f32[256,1], index: 3, kind: output, shape index: {}]
  %s4 = sld [smem:[#allocation0]]
  $region22: #{tpu_custom_call.1} parent=0
    _
  %s6 = ssub.s32 1, %s4
  %s7 = scalar_select 0, %s6, %s4
  %v8 = vstv %s2
  %9 = vst [vmem:[#allocation2] sm:$0x1] %v8
  // Predicated region
  $region2: #{tpu_custom_call.1} parent=0 // pred_check
    _
  $region3: #{tpu_custom_call.1} parent=0 // pred_check_branch
    %11 = sbr.rel (0) target = $region5
  $region4: #{tpu_custom_call.1} parent=0 // pred_region
    _
  $region5: #{tpu_custom_call.1} parent=0 // pred_fallthru
    _
  // Predicated region
  $region6: #{tpu_custom_call.1} parent=0 // pred_check
    _
  $region7: #{tpu_custom_call.1} parent=0 // pred_check_branch
    %13 = sbr.rel (0) target = $region9
  $region8: #{tpu_custom_call.1} parent=0 // pred_region
    _
  $region9: #{tpu_custom_call.1} parent=0 // pred_fallthru
    _
  // Predicated region
  $region10: #{tpu_custom_call.1} parent=0 // pred_check
    _
  $region11: #{tpu_custom_call.1} parent=0 // pred_check_branch
    %15 = sbr.rel (0) target = $region13
  $region12: #{tpu_custom_call.1} parent=0 // pred_region
    _
  $region13: #{tpu_custom_call.1} parent=0 // pred_fallthru
    _
  %v16 = vld [vmem:[%s0] sm:$0xff]
  %v17 = vld [vmem:[%s0 + $0x8] sm:$0xff]
  %v18 = vld [vmem:[%s0 + $0x10] sm:$0xff]
  %v19 = vld [vmem:[%s0 + $0x18] sm:$0xff]
  %v20 = vld [vmem:[%s0 + $0x20] sm:$0xff]
  %v21 = vld [vmem:[%s0 + $0x28] sm:$0xff]
  %v22 = vld [vmem:[%s0 + $0x30] sm:$0xff]
  %v23 = vld [vmem:[%s0 + $0x38] sm:$0xff]
  %v24 = vld [vmem:[%s0 + $0x40] sm:$0xff]
  %v25 = vld [vmem:[%s0 + $0x48] sm:$0xff]
  %v26 = vld [vmem:[%s0 + $0x50] sm:$0xff]
  %v27 = vld [vmem:[%s0 + $0x58] sm:$0xff]
  %v28 = vld [vmem:[%s0 + $0x60] sm:$0xff]
  %v29 = vld [vmem:[%s0 + $0x68] sm:$0xff]
  %v30 = vld [vmem:[%s0 + $0x70] sm:$0xff]
  %v31 = vld [vmem:[%s0 + $0x78] sm:$0xff]
  %v32 = vld [vmem:[%s0 + $0x80] sm:$0xff]
  %v33 = vld [vmem:[%s0 + $0x88] sm:$0xff]
  %v34 = vld [vmem:[%s0 + $0x90] sm:$0xff]
  %v35 = vld [vmem:[%s0 + $0x98] sm:$0xff]
  %v36 = vld [vmem:[%s0 + $0xa0] sm:$0xff]
  %v37 = vld [vmem:[%s0 + $0xa8] sm:$0xff]
  %v38 = vld [vmem:[%s0 + $0xb0] sm:$0xff]
  %v39 = vld [vmem:[%s0 + $0xb8] sm:$0xff]
  %v40 = vld [vmem:[%s0 + $0xc0] sm:$0xff]
  %v41 = vld [vmem:[%s0 + $0xc8] sm:$0xff]
  %v42 = vld [vmem:[%s0 + $0xd0] sm:$0xff]
  %v43 = vld [vmem:[%s0 + $0xd8] sm:$0xff]
  %v44 = vld [vmem:[%s0 + $0xe0] sm:$0xff]
  %v45 = vld [vmem:[%s0 + $0xe8] sm:$0xff]
  %v46 = vld [vmem:[%s0 + $0xf0] sm:$0xff]
  %v47 = vld [vmem:[%s0 + $0xf8] sm:$0xff]
  %v48 = vld [vmem:[%s1] sm:$0x1]
  %v50 = vlaneseq
  %v51 = vshrl.u32 %v50, 7
  %v52 = vsub.s32 0, %v51
  %v53 = vrot.slane %v48, %v52
  %v55 = vmul.f32 %v16, %v53
  %v56 = vmul.f32 %v17, %v53
  %v57 = vmul.f32 %v18, %v53
  %v58 = vmul.f32 %v19, %v53
  %v59 = vmul.f32 %v20, %v53
  %v60 = vmul.f32 %v21, %v53
  %v61 = vmul.f32 %v22, %v53
  %v62 = vmul.f32 %v23, %v53
  %v63 = vmul.f32 %v24, %v53
  %v64 = vmul.f32 %v25, %v53
  %v65 = vmul.f32 %v26, %v53
  %v66 = vmul.f32 %v27, %v53
  %v67 = vmul.f32 %v28, %v53
  %v68 = vmul.f32 %v29, %v53
  %v69 = vmul.f32 %v30, %v53
  %v70 = vmul.f32 %v31, %v53
  %v71 = vmul.f32 %v32, %v53
  %v72 = vmul.f32 %v33, %v53
  %v73 = vmul.f32 %v34, %v53
  %v74 = vmul.f32 %v35, %v53
  %v75 = vmul.f32 %v36, %v53
  %v76 = vmul.f32 %v37, %v53
  %v77 = vmul.f32 %v38, %v53
  %v78 = vmul.f32 %v39, %v53
  %v79 = vmul.f32 %v40, %v53
  %v80 = vmul.f32 %v41, %v53
  %v81 = vmul.f32 %v42, %v53
  %v82 = vmul.f32 %v43, %v53
  %v83 = vmul.f32 %v44, %v53
  %v84 = vmul.f32 %v45, %v53
  %v85 = vmul.f32 %v46, %v53
  %v86 = vmul.f32 %v47, %v53
  %vm87 = vcmask 261120
  %v88 = vsel %vm87, %v55, 0.0
  %89 = vadd.xlane.f32.xlu0 %v88
  %v90 = vpop.xlane.xlu0 %89
  %v91 = vsel %vm87, %v56, 0.0
  %92 = vadd.xlane.f32.xlu0 %v91
  %v93 = vpop.xlane.xlu0 %92
  %v94 = vsel %vm87, %v57, 0.0
  %95 = vadd.xlane.f32.xlu0 %v94
  %v96 = vpop.xlane.xlu0 %95
  %v97 = vsel %vm87, %v58, 0.0
  %98 = vadd.xlane.f32.xlu0 %v97
  %v99 = vpop.xlane.xlu0 %98
  %v100 = vsel %vm87, %v59, 0.0
  %101 = vadd.xlane.f32.xlu0 %v100
  %v102 = vpop.xlane.xlu0 %101
  %v103 = vsel %vm87, %v60, 0.0
  %104 = vadd.xlane.f32.xlu0 %v103
  %v105 = vpop.xlane.xlu0 %104
  %v106 = vsel %vm87, %v61, 0.0
  %107 = vadd.xlane.f32.xlu0 %v106
  %v108 = vpop.xlane.xlu0 %107
  %v109 = vsel %vm87, %v62, 0.0
  %110 = vadd.xlane.f32.xlu0 %v109
  %v111 = vpop.xlane.xlu0 %110
  %v112 = vsel %vm87, %v63, 0.0
  %113 = vadd.xlane.f32.xlu0 %v112
  %v114 = vpop.xlane.xlu0 %113
  %v115 = vsel %vm87, %v64, 0.0
  %116 = vadd.xlane.f32.xlu0 %v115
  %v117 = vpop.xlane.xlu0 %116
  %v118 = vsel %vm87, %v65, 0.0
  %119 = vadd.xlane.f32.xlu0 %v118
  %v120 = vpop.xlane.xlu0 %119
  %v121 = vsel %vm87, %v66, 0.0
  %122 = vadd.xlane.f32.xlu0 %v121
  %v123 = vpop.xlane.xlu0 %122
  %v124 = vsel %vm87, %v67, 0.0
  %125 = vadd.xlane.f32.xlu0 %v124
  %v126 = vpop.xlane.xlu0 %125
  %v127 = vsel %vm87, %v68, 0.0
  %128 = vadd.xlane.f32.xlu0 %v127
  %v129 = vpop.xlane.xlu0 %128
  %v130 = vsel %vm87, %v69, 0.0
  %131 = vadd.xlane.f32.xlu0 %v130
  %v132 = vpop.xlane.xlu0 %131
  %v133 = vsel %vm87, %v70, 0.0
  %134 = vadd.xlane.f32.xlu0 %v133
  %v135 = vpop.xlane.xlu0 %134
  %v136 = vsel %vm87, %v71, 0.0
  %137 = vadd.xlane.f32.xlu0 %v136
  %v138 = vpop.xlane.xlu0 %137
  %v139 = vsel %vm87, %v72, 0.0
  %140 = vadd.xlane.f32.xlu0 %v139
  %v141 = vpop.xlane.xlu0 %140
  %v142 = vsel %vm87, %v73, 0.0
  %143 = vadd.xlane.f32.xlu0 %v142
  %v144 = vpop.xlane.xlu0 %143
  %v145 = vsel %vm87, %v74, 0.0
  %146 = vadd.xlane.f32.xlu0 %v145
  %v147 = vpop.xlane.xlu0 %146
  %v148 = vsel %vm87, %v75, 0.0
  %149 = vadd.xlane.f32.xlu0 %v148
  %v150 = vpop.xlane.xlu0 %149
  %v151 = vsel %vm87, %v76, 0.0
  %152 = vadd.xlane.f32.xlu0 %v151
  %v153 = vpop.xlane.xlu0 %152
  %v154 = vsel %vm87, %v77, 0.0
  %155 = vadd.xlane.f32.xlu0 %v154
  %v156 = vpop.xlane.xlu0 %155
  %v157 = vsel %vm87, %v78, 0.0
  %158 = vadd.xlane.f32.xlu0 %v157
  %v159 = vpop.xlane.xlu0 %158
  %v160 = vsel %vm87, %v79, 0.0
  %161 = vadd.xlane.f32.xlu0 %v160
  %v162 = vpop.xlane.xlu0 %161
  %v163 = vsel %vm87, %v80, 0.0
  %164 = vadd.xlane.f32.xlu0 %v163
  %v165 = vpop.xlane.xlu0 %164
  %v166 = vsel %vm87, %v81, 0.0
  %167 = vadd.xlane.f32.xlu0 %v166
  %v168 = vpop.xlane.xlu0 %167
  %v169 = vsel %vm87, %v82, 0.0
  %170 = vadd.xlane.f32.xlu0 %v169
  %v171 = vpop.xlane.xlu0 %170
  %v172 = vsel %vm87, %v83, 0.0
  %173 = vadd.xlane.f32.xlu0 %v172
  %v174 = vpop.xlane.xlu0 %173
  %v175 = vsel %vm87, %v84, 0.0
  %176 = vadd.xlane.f32.xlu0 %v175
  %v177 = vpop.xlane.xlu0 %176
  %v178 = vsel %vm87, %v85, 0.0
  %179 = vadd.xlane.f32.xlu0 %v178
  %v180 = vpop.xlane.xlu0 %179
  %v181 = vsel %vm87, %v86, 0.0
  %182 = vadd.xlane.f32.xlu0 %v181
  %v183 = vpop.xlane.xlu0 %182
  %v184 = vld [vmem:[#allocation2] sm:$0x1]
  %v186 = vlaneseq
  %v187 = vshrl.u32 %v186, 7
  %v188 = vsub.s32 0, %v187
  %v189 = vrot.slane %v184, %v188
  %v191 = vadd.f32 %v90, %v189
  %v192 = vadd.f32 %v93, %v189
  %v193 = vadd.f32 %v96, %v189
  %v194 = vadd.f32 %v99, %v189
  %v195 = vadd.f32 %v102, %v189
  %v196 = vadd.f32 %v105, %v189
  %v197 = vadd.f32 %v108, %v189
  %v198 = vadd.f32 %v111, %v189
  %v199 = vadd.f32 %v114, %v189
  %v200 = vadd.f32 %v117, %v189
  %v201 = vadd.f32 %v120, %v189
  %v202 = vadd.f32 %v123, %v189
  %v203 = vadd.f32 %v126, %v189
  %v204 = vadd.f32 %v129, %v189
  %v205 = vadd.f32 %v132, %v189
  %v206 = vadd.f32 %v135, %v189
  %v207 = vadd.f32 %v138, %v189
  %v208 = vadd.f32 %v141, %v189
  %v209 = vadd.f32 %v144, %v189
  %v210 = vadd.f32 %v147, %v189
  %v211 = vadd.f32 %v150, %v189
  %v212 = vadd.f32 %v153, %v189
  %v213 = vadd.f32 %v156, %v189
  %v214 = vadd.f32 %v159, %v189
  %v215 = vadd.f32 %v162, %v189
  %v216 = vadd.f32 %v165, %v189
  %v217 = vadd.f32 %v168, %v189
  %v218 = vadd.f32 %v171, %v189
  %v219 = vadd.f32 %v174, %v189
  %v220 = vadd.f32 %v177, %v189
  %v221 = vadd.f32 %v180, %v189
  %v222 = vadd.f32 %v183, %v189
  %v223 = vxor.u32 %v191, 2147483648
  %v224 = vxor.u32 %v192, 2147483648
  %v225 = vxor.u32 %v193, 2147483648
  %v226 = vxor.u32 %v194, 2147483648
  %v227 = vxor.u32 %v195, 2147483648
  %v228 = vxor.u32 %v196, 2147483648
  %v229 = vxor.u32 %v197, 2147483648
  %v230 = vxor.u32 %v198, 2147483648
  %v231 = vxor.u32 %v199, 2147483648
  %v232 = vxor.u32 %v200, 2147483648
  %v233 = vxor.u32 %v201, 2147483648
  %v234 = vxor.u32 %v202, 2147483648
  %v235 = vxor.u32 %v203, 2147483648
  %v236 = vxor.u32 %v204, 2147483648
  %v237 = vxor.u32 %v205, 2147483648
  %v238 = vxor.u32 %v206, 2147483648
  %v239 = vxor.u32 %v207, 2147483648
  %v240 = vxor.u32 %v208, 2147483648
  %v241 = vxor.u32 %v209, 2147483648
  %v242 = vxor.u32 %v210, 2147483648
  %v243 = vxor.u32 %v211, 2147483648
  %v244 = vxor.u32 %v212, 2147483648
  %v245 = vxor.u32 %v213, 2147483648
  %v246 = vxor.u32 %v214, 2147483648
  %v247 = vxor.u32 %v215, 2147483648
  %v248 = vxor.u32 %v216, 2147483648
  %v249 = vxor.u32 %v217, 2147483648
  %v250 = vxor.u32 %v218, 2147483648
  %v251 = vxor.u32 %v219, 2147483648
  %v252 = vxor.u32 %v220, 2147483648
  %v253 = vxor.u32 %v221, 2147483648
  %v254 = vxor.u32 %v222, 2147483648
  %v255 = vmul.f32 %v223, 1.442695
  %v256 = vpow.pop %v255
  %v257 = vmul.f32 %v224, 1.442695
  %v258 = vpow.pop %v257
  %v259 = vmul.f32 %v225, 1.442695
  %v260 = vpow.pop %v259
  %v261 = vmul.f32 %v226, 1.442695
  %v262 = vpow.pop %v261
  %v263 = vmul.f32 %v227, 1.442695
  %v264 = vpow.pop %v263
  %v265 = vmul.f32 %v228, 1.442695
  %v266 = vpow.pop %v265
  %v267 = vmul.f32 %v229, 1.442695
  %v268 = vpow.pop %v267
  %v269 = vmul.f32 %v230, 1.442695
  %v270 = vpow.pop %v269
  %v271 = vmul.f32 %v231, 1.442695
  %v272 = vpow.pop %v271
  %v273 = vmul.f32 %v232, 1.442695
  %v274 = vpow.pop %v273
  %v275 = vmul.f32 %v233, 1.442695
  %v276 = vpow.pop %v275
  %v277 = vmul.f32 %v234, 1.442695
  %v278 = vpow.pop %v277
  %v279 = vmul.f32 %v235, 1.442695
  %v280 = vpow.pop %v279
  %v281 = vmul.f32 %v236, 1.442695
  %v282 = vpow.pop %v281
  %v283 = vmul.f32 %v237, 1.442695
  %v284 = vpow.pop %v283
  %v285 = vmul.f32 %v238, 1.442695
  %v286 = vpow.pop %v285
  %v287 = vmul.f32 %v239, 1.442695
  %v288 = vpow.pop %v287
  %v289 = vmul.f32 %v240, 1.442695
  %v290 = vpow.pop %v289
  %v291 = vmul.f32 %v241, 1.442695
  %v292 = vpow.pop %v291
  %v293 = vmul.f32 %v242, 1.442695
  %v294 = vpow.pop %v293
  %v295 = vmul.f32 %v243, 1.442695
  %v296 = vpow.pop %v295
  %v297 = vmul.f32 %v244, 1.442695
  %v298 = vpow.pop %v297
  %v299 = vmul.f32 %v245, 1.442695
  %v300 = vpow.pop %v299
  %v301 = vmul.f32 %v246, 1.442695
  %v302 = vpow.pop %v301
  %v303 = vmul.f32 %v247, 1.442695
  %v304 = vpow.pop %v303
  %v305 = vmul.f32 %v248, 1.442695
  %v306 = vpow.pop %v305
  %v307 = vmul.f32 %v249, 1.442695
  %v308 = vpow.pop %v307
  %v309 = vmul.f32 %v250, 1.442695
  %v310 = vpow.pop %v309
  %v311 = vmul.f32 %v251, 1.442695
  %v312 = vpow.pop %v311
  %v313 = vmul.f32 %v252, 1.442695
  %v314 = vpow.pop %v313
  %v315 = vmul.f32 %v253, 1.442695
  %v316 = vpow.pop %v315
  %v317 = vmul.f32 %v254, 1.442695
  %v318 = vpow.pop %v317
  %v319 = vadd.f32 %v256, 1.0
  %v320 = vadd.f32 %v258, 1.0
  %v321 = vadd.f32 %v260, 1.0
  %v322 = vadd.f32 %v262, 1.0
  %v323 = vadd.f32 %v264, 1.0
  %v324 = vadd.f32 %v266, 1.0
  %v325 = vadd.f32 %v268, 1.0
  %v326 = vadd.f32 %v270, 1.0
  %v327 = vadd.f32 %v272, 1.0
  %v328 = vadd.f32 %v274, 1.0
  %v329 = vadd.f32 %v276, 1.0
  %v330 = vadd.f32 %v278, 1.0
  %v331 = vadd.f32 %v280, 1.0
  %v332 = vadd.f32 %v282, 1.0
  %v333 = vadd.f32 %v284, 1.0
  %v334 = vadd.f32 %v286, 1.0
  %v335 = vadd.f32 %v288, 1.0
  %v336 = vadd.f32 %v290, 1.0
  %v337 = vadd.f32 %v292, 1.0
  %v338 = vadd.f32 %v294, 1.0
  %v339 = vadd.f32 %v296, 1.0
  %v340 = vadd.f32 %v298, 1.0
  %v341 = vadd.f32 %v300, 1.0
  %v342 = vadd.f32 %v302, 1.0
  %v343 = vadd.f32 %v304, 1.0
  %v344 = vadd.f32 %v306, 1.0
  %v345 = vadd.f32 %v308, 1.0
  %v346 = vadd.f32 %v310, 1.0
  %v347 = vadd.f32 %v312, 1.0
  %v348 = vadd.f32 %v314, 1.0
  %v349 = vadd.f32 %v316, 1.0
  %v350 = vadd.f32 %v318, 1.0
  %v351 = vrcp.pop %v319
  %v352 = vmul.f32 1.0, %v351
  %v353 = vrcp.pop %v320
  %v354 = vmul.f32 1.0, %v353
  %v355 = vrcp.pop %v321
  %v356 = vmul.f32 1.0, %v355
  %v357 = vrcp.pop %v322
  %v358 = vmul.f32 1.0, %v357
  %v359 = vrcp.pop %v323
  %v360 = vmul.f32 1.0, %v359
  %v361 = vrcp.pop %v324
  %v362 = vmul.f32 1.0, %v361
  %v363 = vrcp.pop %v325
  %v364 = vmul.f32 1.0, %v363
  %v365 = vrcp.pop %v326
  %v366 = vmul.f32 1.0, %v365
  %v367 = vrcp.pop %v327
  %v368 = vmul.f32 1.0, %v367
  %v369 = vrcp.pop %v328
  %v370 = vmul.f32 1.0, %v369
  %v371 = vrcp.pop %v329
  %v372 = vmul.f32 1.0, %v371
  %v373 = vrcp.pop %v330
  %v374 = vmul.f32 1.0, %v373
  %v375 = vrcp.pop %v331
  %v376 = vmul.f32 1.0, %v375
  %v377 = vrcp.pop %v332
  %v378 = vmul.f32 1.0, %v377
  %v379 = vrcp.pop %v333
  %v380 = vmul.f32 1.0, %v379
  %v381 = vrcp.pop %v334
  %v382 = vmul.f32 1.0, %v381
  %v383 = vrcp.pop %v335
  %v384 = vmul.f32 1.0, %v383
  %v385 = vrcp.pop %v336
  %v386 = vmul.f32 1.0, %v385
  %v387 = vrcp.pop %v337
  %v388 = vmul.f32 1.0, %v387
  %v389 = vrcp.pop %v338
  %v390 = vmul.f32 1.0, %v389
  %v391 = vrcp.pop %v339
  %v392 = vmul.f32 1.0, %v391
  %v393 = vrcp.pop %v340
  %v394 = vmul.f32 1.0, %v393
  %v395 = vrcp.pop %v341
  %v396 = vmul.f32 1.0, %v395
  %v397 = vrcp.pop %v342
  %v398 = vmul.f32 1.0, %v397
  %v399 = vrcp.pop %v343
  %v400 = vmul.f32 1.0, %v399
  %v401 = vrcp.pop %v344
  %v402 = vmul.f32 1.0, %v401
  %v403 = vrcp.pop %v345
  %v404 = vmul.f32 1.0, %v403
  %v405 = vrcp.pop %v346
  %v406 = vmul.f32 1.0, %v405
  %v407 = vrcp.pop %v347
  %v408 = vmul.f32 1.0, %v407
  %v409 = vrcp.pop %v348
  %v410 = vmul.f32 1.0, %v409
  %v411 = vrcp.pop %v349
  %v412 = vmul.f32 1.0, %v411
  %v413 = vrcp.pop %v350
  %v414 = vmul.f32 1.0, %v413
  %vm415 = vcmask 7168
  %416 = vst.msk [vmem:[%s3] sm:$0xff] %vm415, %v352
  %417 = vst.msk [vmem:[%s3 + $0x8] sm:$0xff] %vm415, %v354
  %418 = vst.msk [vmem:[%s3 + $0x10] sm:$0xff] %vm415, %v356
  %419 = vst.msk [vmem:[%s3 + $0x18] sm:$0xff] %vm415, %v358
  %420 = vst.msk [vmem:[%s3 + $0x20] sm:$0xff] %vm415, %v360
  %421 = vst.msk [vmem:[%s3 + $0x28] sm:$0xff] %vm415, %v362
  %422 = vst.msk [vmem:[%s3 + $0x30] sm:$0xff] %vm415, %v364
  %423 = vst.msk [vmem:[%s3 + $0x38] sm:$0xff] %vm415, %v366
  %424 = vst.msk [vmem:[%s3 + $0x40] sm:$0xff] %vm415, %v368
  %425 = vst.msk [vmem:[%s3 + $0x48] sm:$0xff] %vm415, %v370
  %426 = vst.msk [vmem:[%s3 + $0x50] sm:$0xff] %vm415, %v372
  %427 = vst.msk [vmem:[%s3 + $0x58] sm:$0xff] %vm415, %v374
  %428 = vst.msk [vmem:[%s3 + $0x60] sm:$0xff] %vm415, %v376
  %429 = vst.msk [vmem:[%s3 + $0x68] sm:$0xff] %vm415, %v378
  %430 = vst.msk [vmem:[%s3 + $0x70] sm:$0xff] %vm415, %v380
  %431 = vst.msk [vmem:[%s3 + $0x78] sm:$0xff] %vm415, %v382
  %432 = vst.msk [vmem:[%s3 + $0x80] sm:$0xff] %vm415, %v384
  %433 = vst.msk [vmem:[%s3 + $0x88] sm:$0xff] %vm415, %v386
  %434 = vst.msk [vmem:[%s3 + $0x90] sm:$0xff] %vm415, %v388
  %435 = vst.msk [vmem:[%s3 + $0x98] sm:$0xff] %vm415, %v390
  %436 = vst.msk [vmem:[%s3 + $0xa0] sm:$0xff] %vm415, %v392
  %437 = vst.msk [vmem:[%s3 + $0xa8] sm:$0xff] %vm415, %v394
  %438 = vst.msk [vmem:[%s3 + $0xb0] sm:$0xff] %vm415, %v396
  %439 = vst.msk [vmem:[%s3 + $0xb8] sm:$0xff] %vm415, %v398
  %440 = vst.msk [vmem:[%s3 + $0xc0] sm:$0xff] %vm415, %v400
  %441 = vst.msk [vmem:[%s3 + $0xc8] sm:$0xff] %vm415, %v402
  %442 = vst.msk [vmem:[%s3 + $0xd0] sm:$0xff] %vm415, %v404
  %443 = vst.msk [vmem:[%s3 + $0xd8] sm:$0xff] %vm415, %v406
  %444 = vst.msk [vmem:[%s3 + $0xe0] sm:$0xff] %vm415, %v408
  %445 = vst.msk [vmem:[%s3 + $0xe8] sm:$0xff] %vm415, %v410
  %446 = vst.msk [vmem:[%s3 + $0xf0] sm:$0xff] %vm415, %v412
  %447 = vst.msk [vmem:[%s3 + $0xf8] sm:$0xff] %vm415, %v414
  // Predicated region
  $region14: #{tpu_custom_call.1} parent=0 // pred_check
    _
  $region15: #{tpu_custom_call.1} parent=0 // pred_check_branch
    %449 = sbr.rel (0) target = $region17
  $region16: #{tpu_custom_call.1} parent=0 // pred_region
    _
  $region17: #{tpu_custom_call.1} parent=0 // pred_fallthru
    _
  // Predicated region
  $region18: #{tpu_custom_call.1} parent=0 // pred_check
    _
  $region19: #{tpu_custom_call.1} parent=0 // pred_check_branch
    %451 = sbr.rel (0) target = $region21
  $region20: #{tpu_custom_call.1} parent=0 // pred_region
    _
  $region21: #{tpu_custom_call.1} parent=0 // pred_fallthru
    _

</llo_original>
